<compile_context>
chip_gen: v5e
topology: v5e:2x2
jax: 0.10.0
libtpu: 0.0.40
codegen_flags: <defaults>
</compile_context>

<pallas_src>
import functools

import jax
import jax.numpy as jnp
from jax.experimental import pallas as pl
from jax.experimental.pallas import tpu as pltpu


# ---------------------------------------------------------------------------
# Kernel: one fused affine map  o = x @ M + c   (M, c resident in VMEM).
# ---------------------------------------------------------------------------
def _affine_kernel(x_ref, m_ref, c_ref, o_ref):
    # x_ref: (tb, K) batch tile; m_ref: (K, K) resident; c_ref: (1, K) resident.
    o = jnp.dot(x_ref[...], m_ref[...], preferred_element_type=jnp.float32)
    o_ref[...] = (o + c_ref[...]).astype(o_ref.dtype)


def _run_affine(x2d, M, c, *, max_rows_per_tile):
    """pallas_call wrapper: out = x2d @ M + c, batch-tiled, weights resident."""
    R, K = x2d.shape
    if R <= max_rows_per_tile:
        tb = R                       # single full-extent tile (always legal)
    else:
        tb = max_rows_per_tile       # multiple of 8 -> legal sublane tiling
    grid = (pl.cdiv(R, tb),)

    return pl.pallas_call(
        _affine_kernel,
        out_shape=jax.ShapeDtypeStruct((R, K), x2d.dtype),
        grid=grid,
        in_specs=[
            pl.BlockSpec((tb, K), lambda i: (i, 0)),   # x: batch-tiled
            pl.BlockSpec((K, K), lambda i: (0, 0)),    # M: VMEM-resident
            pl.BlockSpec((1, K), lambda i: (0, 0)),    # c: VMEM-resident
        ],
        out_specs=pl.BlockSpec((tb, K), lambda i: (i, 0)),
        compiler_params=pltpu.CompilerParams(
            dimension_semantics=("parallel",),
        ),
    )(x2d, M, c)


# ---------------------------------------------------------------------------
# Factory: precompute collapsed weights once, return a jitted forward(t, x).
# ---------------------------------------------------------------------------
def make_phi_system_phiinv(A, W, b, *, max_rows_per_tile=4096):
    """Build forward(t, x) = phi(base_system(t, phi_inv(x))), phi(x) = x @ W.T + b.

    All weight algebra (matrix inverse, transposes, collapse to M/c, lane-dense
    block-diagonal packing) happens here, once per parameter set.
    """
    D = A.shape[0]
    assert A.shape == (D, D), "A must be square"
    assert W.shape == (D, D), "W must be square and match the state dim"
    assert b.shape == (D,), "b must have shape (state_dim,)"
    param_dtype = A.dtype
    assert W.dtype == param_dtype and b.dtype == param_dtype, "mixed param dtypes"

    # Inverse + collapse in float32 regardless of param dtype (accuracy), then cast.
    Wf = W.astype(jnp.float32)
    Af = A.astype(jnp.float32)
    bf = b.astype(jnp.float32)
    winv_T = jnp.linalg.inv(Wf).T
    # out = (x - b) @ W^{-T} @ A^T @ W^T + b  =  x @ M + c
    M = winv_T @ Af.T @ Wf.T
    c = (bf - bf @ M)[None, :]
    M = M.astype(param_dtype)
    c = c.astype(param_dtype)

    # Lane-dense packing factor: p rows of x per packed 128-lane row.
    p = 128 // D if (D < 128 and 128 % D == 0) else 1
    if p > 1:
        Mbig = jax.scipy.linalg.block_diag(*([M] * p))   # (p*D, p*D), 128x128
        cbig = jnp.tile(c, (1, p))                        # (1, p*D)
    else:
        Mbig, cbig = M, c

    def _forward(t, x):
        del t  # unused by the forward (API parity with the torch module)
        if x.ndim == 1:  # mirrors `if x.dim() == 1: x = x.unsqueeze(0)`
            x = x[None, :]
        B, Dx = x.shape
        assert Dx == D, "state dim mismatch"
        assert x.dtype == param_dtype, "input dtype must match parameter dtype"

        if p > 1 and B % p == 0 and B >= p:
            # Lane-dense path: (B, D) -> (B//p, p*D), one 128-wide MXU matmul,
            # unmasked 128-lane loads/stores, p batch rows per packed row.
            xp = x.reshape(B // p, p * D)
            out = _run_affine(xp, Mbig, cbig, max_rows_per_tile=max_rows_per_tile)
            out = out.reshape(B, D)
        else:
            # Generic fallback (ragged B or D not dividing 128): lane-sparse but correct.
            out = _run_affine(x, M, c, max_rows_per_tile=max_rows_per_tile)

        # torch's `.squeeze(0)`: drops the leading dim only when it is size 1.
        if out.shape[0] == 1:
            out = out[0]
        return out

    return jax.jit(_forward)


if __name__ == "__main__":
    key = jax.random.PRNGKey(0)
    kx, ka, kw, kb = jax.random.split(key, 4)

    batch, dim = 8, 16  # (batch_size, state_dim)
    x = jax.random.normal(kx, (batch, dim), dtype=jnp.float32)
    # Base linear system matrix A (dx/dt = x @ A.T).
    A = 0.1 * jax.random.normal(ka, (dim, dim), dtype=jnp.float32)
    # Well-conditioned invertible affine diffeomorphism phi(x) = x @ W.T + b.
    W = jnp.eye(dim, dtype=jnp.float32) + 0.1 * jax.random.normal(
        kw, (dim, dim), dtype=jnp.float32
    )
    b = 0.1 * jax.random.normal(kb, (dim,), dtype=jnp.float32)

    t = jnp.float32(0.0)  # unused by the forward, kept for signature parity

    # Weight prep happens once here; repeated forward calls reuse M / Mbig / c.
    forward = make_phi_system_phiinv(A, W, b)

    dxdt = jax.block_until_ready(forward(t, x))

    # Pure-JAX reference of the torch module's forward (un-collapsed algebra).
    z_ref = (x - b[None, :]) @ jnp.linalg.inv(W).T
    d_ref = z_ref @ A.T
    ref = d_ref @ W.T + b[None, :]

    assert dxdt.shape == (batch, dim)
    assert jnp.allclose(dxdt, ref, atol=1e-4, rtol=1e-4), float(
        jnp.max(jnp.abs(dxdt - ref))
    )

    # 1-D input path (unsqueeze + squeeze(0) parity) -> generic fallback kernel.
    d1 = jax.block_until_ready(forward(t, x[0]))
    assert d1.shape == (dim,)
    assert jnp.allclose(d1, ref[0], atol=1e-4, rtol=1e-4)

    # Ragged batch (not a multiple of 8) -> generic fallback kernel.
    d5 = jax.block_until_ready(forward(t, x[:5]))
    assert d5.shape == (5, dim)
    assert jnp.allclose(d5, ref[:5], atol=1e-4, rtol=1e-4)

    print("KERNEL_OK")
</pallas_src>

<mosaic_0001>
module attributes {stable_mosaic.version = 11 : i64} {
  func.func @_affine_kernel(%arg0: i32, %arg1: memref<1x128xf32, #tpu.memory_space<vmem>>, %arg2: memref<128x128xf32, #tpu.memory_space<vmem>>, %arg3: memref<1x128xf32, #tpu.memory_space<vmem>>, %arg4: memref<1x128xf32, #tpu.memory_space<vmem>>) attributes {dimension_semantics = [#tpu.dimension_semantics<parallel>], iteration_bounds = array<i64: 1>, scalar_prefetch = 0 : i64, scratch_operands = 0 : i64, tpu.core_type = #tpu.core_type<tc>, window_params = [{transform_indices = @transform_0, window_bounds = array<i64: 1, 128>}, {pipeline_mode = #tpu.pipeline_mode<synchronous>, transform_indices = @transform_1, window_bounds = array<i64: 128, 128>}, {pipeline_mode = #tpu.pipeline_mode<synchronous>, transform_indices = @transform_2, window_bounds = array<i64: 1, 128>}, {transform_indices = @transform_3, window_bounds = array<i64: 1, 128>}]} {
    %c0 = arith.constant 0 : index
    %c0_0 = arith.constant 0 : index
    %0 = vector.load %arg1[%c0, %c0_0] : memref<1x128xf32, #tpu.memory_space<vmem>>, vector<1x128xf32>
    %c0_1 = arith.constant 0 : index
    %c0_2 = arith.constant 0 : index
    %1 = vector.load %arg2[%c0_1, %c0_2] : memref<128x128xf32, #tpu.memory_space<vmem>>, vector<128x128xf32>
    %cst = arith.constant dense<0.000000e+00> : vector<1x128xf32>
    %2 = tpu.matmul %0, %1, %cst {dimension_numbers = #tpu.dot_dimension_numbers<[1], [0], [0], [1], [0, 0, 1, 1], [], []>} : vector<1x128xf32>, vector<128x128xf32>, vector<1x128xf32> -> vector<1x128xf32>
    %c0_3 = arith.constant 0 : index
    %c0_4 = arith.constant 0 : index
    %3 = vector.load %arg3[%c0_3, %c0_4] : memref<1x128xf32, #tpu.memory_space<vmem>>, vector<1x128xf32>
    %4 = arith.addf %2, %3 : vector<1x128xf32>
    %c0_5 = arith.constant 0 : index
    %c0_6 = arith.constant 0 : index
    %5 = vector.load %arg4[%c0_5, %c0_6] : memref<1x128xf32, #tpu.memory_space<vmem>>, vector<1x128xf32>
    tpu.vector_store %arg4[%c0_5, %c0_6], %4 {strides = array<i32>} : memref<1x128xf32, #tpu.memory_space<vmem>>, vector<1x128xf32>,
    return
  }
  func.func @transform_0(%arg0: i32) -> (i32, i32) {
    %c0_i32 = arith.constant 0 : i32
    %c0_i32_0 = arith.constant 0 : i32
    return %arg0, %c0_i32 : i32, i32
  }
  func.func @transform_1(%arg0: i32) -> (i32, i32) {
    %c0_i32 = arith.constant 0 : i32
    %c0_i32_0 = arith.constant 0 : i32
    %c0_i32_1 = arith.constant 0 : i32
    return %c0_i32, %c0_i32_0 : i32, i32
  }
  func.func @transform_2(%arg0: i32) -> (i32, i32) {
    %c0_i32 = arith.constant 0 : i32
    %c0_i32_0 = arith.constant 0 : i32
    %c0_i32_1 = arith.constant 0 : i32
    return %c0_i32, %c0_i32_0 : i32, i32
  }
  func.func @transform_3(%arg0: i32) -> (i32, i32) {
    %c0_i32 = arith.constant 0 : i32
    %c0_i32_0 = arith.constant 0 : i32
    return %arg0, %c0_i32 : i32, i32
  }
}

</mosaic_0001>

<llo_original>
// kernel: _forward.1
$region0: #{_forward.1}
  #allocation0 [shape = 'u32[]', space=smem, size = 0x4, offset = 0x4, fixed_abs, tag = 'smem constant byte address 0x4 - core index']
  #allocation1 [shape = 'u32[72,128]{1,0:T(1,128)}', space=vmem, size = 0x9000, scoped, tag = 'internal scratch']
  %s0 = inlined_call_operand.vmem [shape: f32[1,128], index: 0, kind: input, shape index: {}]
  %s1 = inlined_call_operand.hbm [shape: f32[128,128], index: 1, kind: input, shape index: {}]
  %s2 = inlined_call_operand.vmem [shape: f32[1,128], index: 2, kind: input, shape index: {}]
  %s3 = inlined_call_operand.vmem [shape: f32[1,128], index: 3, kind: output, shape index: {}]
  %s4 = sld [smem:[#allocation0]]
  $region26: #{_forward.1} parent=0
    _
  %s6 = ssub.s32 1, %s4
  %s7 = scalar_select 0, %s6, %s4
  $region1: #{_forward.1} parent=0
    #allocation2 [shape = 'u8[65536]{0}', space=vmem, size = 0x10000, scoped, tag = 'input window, operand 1, single buffered']
    #allocation3 [shape = 's32[1]{0}', space=sflag, size = 0x4, scoped, tag = 'scoped memory for _forward.1']
    %8 = vsyncpa [#allocation3], 0
    // Predicated region
    $region2: #{_forward.1} parent=1 // pred_check
      _
    $region3: #{_forward.1} parent=1 // pred_check_branch
      %10 = sbr.rel (0) target = $region5
    $region4: #{_forward.1} parent=1 // pred_region
      _
    $region5: #{_forward.1} parent=1 // pred_fallthru
      _
    // Predicated region
    $region6: #{_forward.1} parent=1 // pred_check
      _
    $region7: #{_forward.1} parent=1 // pred_check_branch
      %12 = sbr.rel (0) target = $region9
    $region8: #{_forward.1} parent=1 // pred_region
      %14 = vsyncadd [#allocation3], 0
      %s15 = sshll.u32 %s1, 4
      %s16 = int_to_ptr.hbm [resolvable:$true] %s15
      %s17 = sshll.u32 [#allocation2], 4
      %s18 = int_to_ptr.vmem [resolvable:$true] %s17
      %23 = dma.hbm_to_vmem [thread:$0]  %s16, 2048, %s18, [#allocation3], 128, 128, 8
    $region9: #{_forward.1} parent=1 // pred_fallthru
      _
    // Predicated region
    $region10: #{_forward.1} parent=1 // pred_check
      _
    $region11: #{_forward.1} parent=1 // pred_check_branch
      %25 = sbr.rel (0) target = $region13
    $region12: #{_forward.1} parent=1 // pred_region
      _
    $region13: #{_forward.1} parent=1 // pred_fallthru
      _
    // Predicated region
    $region14: #{_forward.1} parent=1 // pred_check
      _
    $region15: #{_forward.1} parent=1 // pred_check_branch
      %27 = sbr.rel (0) target = $region17
    $region16: #{_forward.1} parent=1 // pred_region
      %29 = dma.done [#allocation3], 2048
    $region17: #{_forward.1} parent=1 // pred_fallthru
      _
    %v30 = vld [vmem:[%s0] sm:$0x1]
    %v31 = vld [vmem:[#allocation2] sm:$0xff]
    %v32 = vld [vmem:[#allocation2 + $0x8] sm:$0xff]
    %v33 = vld [vmem:[#allocation2 + $0x10] sm:$0xff]
    %v34 = vld [vmem:[#allocation2 + $0x18] sm:$0xff]
    %v35 = vld [vmem:[#allocation2 + $0x20] sm:$0xff]
    %v36 = vld [vmem:[#allocation2 + $0x28] sm:$0xff]
    %v37 = vld [vmem:[#allocation2 + $0x30] sm:$0xff]
    %v38 = vld [vmem:[#allocation2 + $0x38] sm:$0xff]
    %v39 = vld [vmem:[#allocation2 + $0x40] sm:$0xff]
    %v40 = vld [vmem:[#allocation2 + $0x48] sm:$0xff]
    %v41 = vld [vmem:[#allocation2 + $0x50] sm:$0xff]
    %v42 = vld [vmem:[#allocation2 + $0x58] sm:$0xff]
    %v43 = vld [vmem:[#allocation2 + $0x60] sm:$0xff]
    %v44 = vld [vmem:[#allocation2 + $0x68] sm:$0xff]
    %v45 = vld [vmem:[#allocation2 + $0x70] sm:$0xff]
    %v46 = vld [vmem:[#allocation2 + $0x78] sm:$0xff]
    %v47 = vld [vmem:[%s2] sm:$0x1]
    %48 = vmatpush.msra.mxu0 %v46
    %49 = vmatpush.msra.mxu0 %v45
    %50 = vmatpush.msra.mxu0 %v44
    %51 = vmatpush.msra.mxu0 %v43
    %52 = vmatpush.msra.mxu0 %v42
    %53 = vmatpush.msra.mxu0 %v41
    %54 = vmatpush.msra.mxu0 %v40
    %55 = vmatpush.msra.mxu0 %v39
    %56 = vmatpush.msra.mxu0 %v38
    %57 = vmatpush.msra.mxu0 %v37
    %58 = vmatpush.msra.mxu0 %v36
    %59 = vmatpush.msra.mxu0 %v35
    %60 = vmatpush.msra.mxu0 %v34
    %61 = vmatpush.msra.mxu0 %v33
    %62 = vmatpush.msra.mxu0 %v32
    %63 = vmatpush.msra.mxu0 %v31
    %64 = vmatmul.f32.gmra.mxu0 %v30
    %v65 = vpop.f32.mrf.mxu0
    %v66 = vadd.f32 %v47, %v65
    %67 = vdwg.mxu0
    %68 = vst [vmem:[%s3] sm:$0x1] %v66
    // Predicated region
    $region18: #{_forward.1} parent=1 // pred_check
      _
    $region19: #{_forward.1} parent=1 // pred_check_branch
      %70 = sbr.rel (0) target = $region21
    $region20: #{_forward.1} parent=1 // pred_region
      _
    $region21: #{_forward.1} parent=1 // pred_fallthru
      _
    // Predicated region
    $region22: #{_forward.1} parent=1 // pred_check
      _
    $region23: #{_forward.1} parent=1 // pred_check_branch
      %72 = sbr.rel (0) target = $region25
    $region24: #{_forward.1} parent=1 // pred_region
      _
    $region25: #{_forward.1} parent=1 // pred_fallthru
      _
    %73 = vsyncpa [#allocation3], 1

</llo_original>
